<compile_context>
chip_gen: v7x
topology: tpu7x:2x2x1
jax: 0.10.0
libtpu: 0.0.40
codegen_flags: <defaults>
</compile_context>

<pallas_src>
import functools

import numpy as np
import jax
import jax.numpy as jnp
from jax import lax
from jax.experimental import pallas as pl
from jax.experimental.pallas import tpu as pltpu

# pywt.Wavelet('haar').filter_bank[0] (dec_lo), deterministic constant.
HAAR_DEC_LO = (0.7071067811865476, 0.7071067811865476)

_TB_CAP = 128                              # static-unroll cap: planes per grid step
_VMEM_BLOCK_BUDGET = 36 * 1024 * 1024      # double-buffered block target (v7x-safe)


def _padded_bytes(rows, cols, itemsize=4):
    """VMEM footprint of one f32 block after (8, 128) tile padding."""
    return (-(-rows // 8) * 8) * (-(-cols // 128) * 128) * itemsize


def _pick_tb(n, h, w):
    """Planes per grid step: divisor of N, (8,·)-aligned blocks, VMEM-bounded,
    capped for the static per-plane unroll, with >= 2 grid steps when possible
    (megacore)."""
    rpp = w // 4 + w

    def ok(tb):
        if n % tb:
            return False
        if tb != n:  # blocks equal to the full array dims are always spec-legal
            if (tb * h) % 8 or (tb * (w // 4)) % 8 or (tb * rpp) % 8:
                return False
        per = (_padded_bytes(tb * h, w)            # row-view input block
               + _padded_bytes(tb * (w // 4), 4 * h)   # grouped-view input block
               + _padded_bytes(tb * rpp, h))       # fused output block
        return 2 * per <= _VMEM_BLOCK_BUDGET       # x2 for double buffering

    valid = [tb for tb in range(1, min(n, _TB_CAP) + 1) if ok(tb)]
    if not valid:
        return n                                    # rare fallback: whole array
    multi = [tb for tb in valid if n // tb >= 2]    # keep >= 2 steps for megacore
    return max(multi) if multi else max(valid)


def _wavelet_kernel(xf_ref, xg_ref, cw_ref, out_ref, *, f0, f1, tb, h, w):
    """Processes TB planes per grid step.

    xf_ref  : (TB*H, W)        row view of the TB input planes
    xg_ref  : (TB*W/4, 4H)     grouped-row view of the same planes
    cw_ref  : (4H, H)          fused low-pass + 2x2 pool (0.25 folded) + packing
    out_ref : (TB*(W/4+W), H)  fused coefficients: per plane, W/4 packed approx
                               rows followed by the W rows of detail = high.T
    """
    w4 = w // 4
    stride = w4 + w  # output rows per plane

    # Approx path: one MXU matmul whose result is already in the fused layout.
    packed = jnp.dot(xg_ref[...], cw_ref[...],
                     preferred_element_type=jnp.float32)          # (TB*W/4, H)

    # Right-edge mask for the 2-tap high-pass (f1 folded in), hoisted out of the
    # plane loop:  high[:, j] = f0*x[:, j] + f1*x[:, j+1]  (zero past the edge).
    edge = jnp.where(
        lax.broadcasted_iota(jnp.int32, (h, w), 1) == w - 1, 0.0, f1)  # (H, W)

    # Detail path + stores: per-plane sublane slabs, static offsets (see TODO).
    for p in range(tb):
        o = p * stride
        # Packed approx slab -> final rows [o, o+W/4).
        out_ref[o:o + w4, :] = packed[p * w4:(p + 1) * w4, :]
        # High-pass on the (H, W) slab, transpose, store -> rows [o+W/4, o+stride).
        xs = xf_ref[p * h:(p + 1) * h, :]                              # (H, W)
        high = f0 * xs + edge * pltpu.roll(xs, shift=w - 1, axis=1)
        out_ref[o + w4:o + stride, :] = high.T                         # (W, H)


def wavelet_transform(x, filters=HAAR_DEC_LO):
    """x: (B, C, H, W) float32 (NCHW). Returns (B, C, (H//2)*(W//2) + H*W)."""
    B, C, H, W = x.shape
    assert H % 2 == 0 and W % 2 == 0, "even spatial dims expected (level-1 Haar)"
    assert W % 4 == 0 and H % (W // 2) == 0, (
        "fused-output fast path requires W % 4 == 0 and (W/2) | H")
    f0 = float(filters[0])
    f1 = float(filters[1])

    N = B * C
    tb = _pick_tb(N, H, W)
    rpp = W // 4 + W                        # fused output rows per plane
    dA = (H // 2) * (W // 2)
    D = dA + H * W                          # == rpp * H

    # Low-pass conv taps fused with column-pair pooling:
    #   cw[t, c]: low[:, 2c] + low[:, 2c+1] = f0*x[:,2c-1] + (f0+f1)*x[:,2c] + f1*x[:,2c+1]
    cw = np.zeros((W, W // 2), np.float64)
    for c in range(W // 2):
        if 2 * c - 1 >= 0:
            cw[2 * c - 1, c] += f0
        cw[2 * c, c] += f0 + f1
        cw[2 * c + 1, c] += f1

    # CW_big: grouped-row view (4H lanes = 4H/W consecutive image rows) -> one
    # packed approx row of H lanes.  Fuses the row-pair pooling, the 0.25 average
    # scale and the packing of approx into the fused per-plane layout.
    g = (2 * H) // W                        # approx rows per packed output row
    cw_big = np.zeros((4 * H, H), np.float64)
    for j in range(g):
        for m in (2 * j, 2 * j + 1):        # the two image rows of approx row u*g+j
            cw_big[m * W:(m + 1) * W, j * (W // 2):(j + 1) * (W // 2)] = cw
    cw_big = jnp.asarray(0.25 * cw_big, dtype=jnp.float32)          # (4H, H)

    xf32 = x.astype(jnp.float32)
    xf = xf32.reshape(N * H, W)             # row view       (free bitcast)
    xg = xf32.reshape(N * (W // 4), 4 * H)  # grouped view   (free bitcast)

    kernel = functools.partial(_wavelet_kernel, f0=f0, f1=f1, tb=tb, h=H, w=W)
    out = pl.pallas_call(
        kernel,
        out_shape=jax.ShapeDtypeStruct((N * rpp, H), jnp.float32),
        grid=(N // tb,),
        in_specs=[
            pl.BlockSpec((tb * H, W), lambda i: (i, 0)),
            pl.BlockSpec((tb * (W // 4), 4 * H), lambda i: (i, 0)),
            pl.BlockSpec((4 * H, H), lambda i: (0, 0)),
        ],
        out_specs=pl.BlockSpec((tb * rpp, H), lambda i: (i, 0)),
        compiler_params=pltpu.CompilerParams(
            dimension_semantics=("parallel",),
            vmem_limit_bytes=48 * 1024 * 1024,   # v7x-safe; usage stays well below
        ),
    )(xf, xg, cw_big)

    # The concat is already fused: this reshape is a free (row-major) bitcast.
    return out.reshape(B, C, D)


def _reference(x, filters):
    """Pure-JAX reference of the interpreted forward pass (for self-check)."""
    B, C, H, W = x.shape
    f0, f1 = filters[0], filters[1]
    xp = jnp.pad(x, ((0, 0), (0, 0), (0, 0), (1, 1)))
    conv = f0 * xp[..., :-1] + f1 * xp[..., 1:]                # (B, C, H, W+1)
    low = conv
    high = conv[..., 1:]                                       # (B, C, H, W)
    approx = low[..., :W].reshape(B, C, H // 2, 2, W // 2, 2).mean(axis=(3, 5))
    detail = jnp.swapaxes(high, 2, 3)
    return jnp.concatenate(
        [approx.reshape(B, C, -1), detail.reshape(B, C, -1)], axis=-1)


if __name__ == "__main__":
    key = jax.random.PRNGKey(0)
    B, C, H, W = 2, 4, 16, 16
    x = jax.random.normal(key, (B, C, H, W), dtype=jnp.float32)

    out = jax.jit(wavelet_transform)(x)
    out = jax.block_until_ready(out)

    expected_shape = (B, C, (H // 2) * (W // 2) + H * W)
    assert out.shape == expected_shape, (out.shape, expected_shape)

    ref = jax.block_until_ready(
        _reference(x, jnp.asarray(HAAR_DEC_LO, dtype=jnp.float32)))
    np.testing.assert_allclose(np.asarray(out), np.asarray(ref), rtol=1e-5, atol=1e-5)

    print("KERNEL_OK")
</pallas_src>

<mosaic_0001>
module attributes {stable_mosaic.version = 11 : i64} {
  func.func @_wavelet_kernel(%arg0: i32, %arg1: memref<64x16xf32, #tpu.memory_space<vmem>>, %arg2: memref<16x64xf32, #tpu.memory_space<vmem>>, %arg3: memref<64x16xf32, #tpu.memory_space<vmem>>, %arg4: memref<80x16xf32, #tpu.memory_space<vmem>>) attributes {dimension_semantics = [#tpu.dimension_semantics<parallel>], iteration_bounds = array<i64: 2>, scalar_prefetch = 0 : i64, scratch_operands = 0 : i64, tpu.core_type = #tpu.core_type<tc>, window_params = [{transform_indices = @transform_0, window_bounds = array<i64: 64, 16>}, {transform_indices = @transform_1, window_bounds = array<i64: 16, 64>}, {pipeline_mode = #tpu.pipeline_mode<synchronous>, transform_indices = @transform_2, window_bounds = array<i64: 64, 16>}, {transform_indices = @transform_3, window_bounds = array<i64: 80, 16>}]} {
    %c0 = arith.constant 0 : index
    %c0_0 = arith.constant 0 : index
    %0 = vector.load %arg2[%c0, %c0_0] : memref<16x64xf32, #tpu.memory_space<vmem>>, vector<16x64xf32>
    %c0_1 = arith.constant 0 : index
    %c0_2 = arith.constant 0 : index
    %1 = vector.load %arg3[%c0_1, %c0_2] : memref<64x16xf32, #tpu.memory_space<vmem>>, vector<64x16xf32>
    %cst = arith.constant dense<0.000000e+00> : vector<16x16xf32>
    %2 = tpu.matmul %0, %1, %cst {dimension_numbers = #tpu.dot_dimension_numbers<[1], [0], [0], [1], [0, 0, 1, 1], [], []>} : vector<16x64xf32>, vector<64x16xf32>, vector<16x16xf32> -> vector<16x16xf32>
    %3 = tpu.iota {dimensions = array<i32: 1>} : vector<16x16xi32>
    %c15_i32 = arith.constant 15 : i32
    %4 = vector.broadcast %c15_i32 : i32 to vector<16x16xi32>
    %5 = arith.cmpi eq, %3, %4 : vector<16x16xi32>
    %cst_3 = arith.constant 0.000000e+00 : f32
    %cst_4 = arith.constant 0.707106769 : f32
    %6 = vector.broadcast %cst_3 : f32 to vector<16x16xf32>
    %7 = vector.broadcast %cst_4 : f32 to vector<16x16xf32>
    %8 = arith.select %5, %6, %7 : vector<16x16xi1>, vector<16x16xf32>
    %9 = vector.extract_strided_slice %2 {offsets = [0, 0], sizes = [4, 16], strides = [1, 1]} : vector<16x16xf32> to vector<4x16xf32>
    %c0_5 = arith.constant 0 : index
    %c0_6 = arith.constant 0 : index
    %10 = vector.load %arg4[%c0_5, %c0_6] : memref<80x16xf32, #tpu.memory_space<vmem>>, vector<4x16xf32>
    tpu.vector_store %arg4[%c0_5, %c0_6], %9 {strides = array<i32>} : memref<80x16xf32, #tpu.memory_space<vmem>>, vector<4x16xf32>,
    %c0_7 = arith.constant 0 : index
    %c0_8 = arith.constant 0 : index
    %11 = vector.load %arg1[%c0_7, %c0_8] : memref<64x16xf32, #tpu.memory_space<vmem>>, vector<16x16xf32>
    %cst_9 = arith.constant 0.707106769 : f32
    %12 = vector.broadcast %cst_9 : f32 to vector<16x16xf32>
    %13 = arith.mulf %12, %11 : vector<16x16xf32>
    %c15_i32_10 = arith.constant 15 : i32
    %14 = tpu.dynamic_rotate %11 by %c15_i32_10 dim 1 : vector<16x16xf32>, i32 -> vector<16x16xf32>
    %15 = arith.mulf %8, %14 : vector<16x16xf32>
    %16 = arith.addf %13, %15 : vector<16x16xf32>
    %17 = tpu.transpose %16, [1, 0] : vector<16x16xf32> -> vector<16x16xf32>
    %c4 = arith.constant 4 : index
    %c0_11 = arith.constant 0 : index
    %18 = vector.load %arg4[%c4, %c0_11] : memref<80x16xf32, #tpu.memory_space<vmem>>, vector<16x16xf32>
    tpu.vector_store %arg4[%c4, %c0_11], %17 {strides = array<i32>} : memref<80x16xf32, #tpu.memory_space<vmem>>, vector<16x16xf32>,
    %19 = vector.extract_strided_slice %2 {offsets = [4, 0], sizes = [4, 16], strides = [1, 1]} : vector<16x16xf32> to vector<4x16xf32>
    %c20 = arith.constant 20 : index
    %c0_12 = arith.constant 0 : index
    %20 = vector.load %arg4[%c20, %c0_12] : memref<80x16xf32, #tpu.memory_space<vmem>>, vector<4x16xf32>
    tpu.vector_store %arg4[%c20, %c0_12], %19 {strides = array<i32>} : memref<80x16xf32, #tpu.memory_space<vmem>>, vector<4x16xf32>,
    %c16 = arith.constant 16 : index
    %c0_13 = arith.constant 0 : index
    %21 = vector.load %arg1[%c16, %c0_13] : memref<64x16xf32, #tpu.memory_space<vmem>>, vector<16x16xf32>
    %cst_14 = arith.constant 0.707106769 : f32
    %22 = vector.broadcast %cst_14 : f32 to vector<16x16xf32>
    %23 = arith.mulf %22, %21 : vector<16x16xf32>
    %c15_i32_15 = arith.constant 15 : i32
    %24 = tpu.dynamic_rotate %21 by %c15_i32_15 dim 1 : vector<16x16xf32>, i32 -> vector<16x16xf32>
    %25 = arith.mulf %8, %24 : vector<16x16xf32>
    %26 = arith.addf %23, %25 : vector<16x16xf32>
    %27 = tpu.transpose %26, [1, 0] : vector<16x16xf32> -> vector<16x16xf32>
    %c24 = arith.constant 24 : index
    %c0_16 = arith.constant 0 : index
    %28 = vector.load %arg4[%c24, %c0_16] : memref<80x16xf32, #tpu.memory_space<vmem>>, vector<16x16xf32>
    tpu.vector_store %arg4[%c24, %c0_16], %27 {strides = array<i32>} : memref<80x16xf32, #tpu.memory_space<vmem>>, vector<16x16xf32>,
    %29 = vector.extract_strided_slice %2 {offsets = [8, 0], sizes = [4, 16], strides = [1, 1]} : vector<16x16xf32> to vector<4x16xf32>
    %c40 = arith.constant 40 : index
    %c0_17 = arith.constant 0 : index
    %30 = vector.load %arg4[%c40, %c0_17] : memref<80x16xf32, #tpu.memory_space<vmem>>, vector<4x16xf32>
    tpu.vector_store %arg4[%c40, %c0_17], %29 {strides = array<i32>} : memref<80x16xf32, #tpu.memory_space<vmem>>, vector<4x16xf32>,
    %c32 = arith.constant 32 : index
    %c0_18 = arith.constant 0 : index
    %31 = vector.load %arg1[%c32, %c0_18] : memref<64x16xf32, #tpu.memory_space<vmem>>, vector<16x16xf32>
    %cst_19 = arith.constant 0.707106769 : f32
    %32 = vector.broadcast %cst_19 : f32 to vector<16x16xf32>
    %33 = arith.mulf %32, %31 : vector<16x16xf32>
    %c15_i32_20 = arith.constant 15 : i32
    %34 = tpu.dynamic_rotate %31 by %c15_i32_20 dim 1 : vector<16x16xf32>, i32 -> vector<16x16xf32>
    %35 = arith.mulf %8, %34 : vector<16x16xf32>
    %36 = arith.addf %33, %35 : vector<16x16xf32>
    %37 = tpu.transpose %36, [1, 0] : vector<16x16xf32> -> vector<16x16xf32>
    %c44 = arith.constant 44 : index
    %c0_21 = arith.constant 0 : index
    %38 = vector.load %arg4[%c44, %c0_21] : memref<80x16xf32, #tpu.memory_space<vmem>>, vector<16x16xf32>
    tpu.vector_store %arg4[%c44, %c0_21], %37 {strides = array<i32>} : memref<80x16xf32, #tpu.memory_space<vmem>>, vector<16x16xf32>,
    %39 = vector.extract_strided_slice %2 {offsets = [12, 0], sizes = [4, 16], strides = [1, 1]} : vector<16x16xf32> to vector<4x16xf32>
    %c60 = arith.constant 60 : index
    %c0_22 = arith.constant 0 : index
    %40 = vector.load %arg4[%c60, %c0_22] : memref<80x16xf32, #tpu.memory_space<vmem>>, vector<4x16xf32>
    tpu.vector_store %arg4[%c60, %c0_22], %39 {strides = array<i32>} : memref<80x16xf32, #tpu.memory_space<vmem>>, vector<4x16xf32>,
    %c48 = arith.constant 48 : index
    %c0_23 = arith.constant 0 : index
    %41 = vector.load %arg1[%c48, %c0_23] : memref<64x16xf32, #tpu.memory_space<vmem>>, vector<16x16xf32>
    %cst_24 = arith.constant 0.707106769 : f32
    %42 = vector.broadcast %cst_24 : f32 to vector<16x16xf32>
    %43 = arith.mulf %42, %41 : vector<16x16xf32>
    %c15_i32_25 = arith.constant 15 : i32
    %44 = tpu.dynamic_rotate %41 by %c15_i32_25 dim 1 : vector<16x16xf32>, i32 -> vector<16x16xf32>
    %45 = arith.mulf %8, %44 : vector<16x16xf32>
    %46 = arith.addf %43, %45 : vector<16x16xf32>
    %47 = tpu.transpose %46, [1, 0] : vector<16x16xf32> -> vector<16x16xf32>
    %c64 = arith.constant 64 : index
    %c0_26 = arith.constant 0 : index
    %48 = vector.load %arg4[%c64, %c0_26] : memref<80x16xf32, #tpu.memory_space<vmem>>, vector<16x16xf32>
    tpu.vector_store %arg4[%c64, %c0_26], %47 {strides = array<i32>} : memref<80x16xf32, #tpu.memory_space<vmem>>, vector<16x16xf32>,
    return
  }
  func.func @transform_0(%arg0: i32) -> (i32, i32) {
    %c0_i32 = arith.constant 0 : i32
    %c0_i32_0 = arith.constant 0 : i32
    return %arg0, %c0_i32 : i32, i32
  }
  func.func @transform_1(%arg0: i32) -> (i32, i32) {
    %c0_i32 = arith.constant 0 : i32
    %c0_i32_0 = arith.constant 0 : i32
    return %arg0, %c0_i32 : i32, i32
  }
  func.func @transform_2(%arg0: i32) -> (i32, i32) {
    %c0_i32 = arith.constant 0 : i32
    %c0_i32_0 = arith.constant 0 : i32
    %c0_i32_1 = arith.constant 0 : i32
    return %c0_i32, %c0_i32_0 : i32, i32
  }
  func.func @transform_3(%arg0: i32) -> (i32, i32) {
    %c0_i32 = arith.constant 0 : i32
    %c0_i32_0 = arith.constant 0 : i32
    return %arg0, %c0_i32 : i32, i32
  }
}

</mosaic_0001>

<llo_original>
// kernel: wavelet_transform.1
$region0: #{wavelet_transform.1}
  #allocation0 [shape = 'u32[]', space=smem, size = 0x4, offset = 0x4, fixed_abs, tag = 'smem constant byte address 0x4 - core index']
  #allocation1 [shape = 'u32[144,128]{1,0:T(1,128)}', space=vmem, size = 0x12000, scoped, tag = 'internal scratch']
  %s0 = inlined_call_operand.vmem [shape: f32[128,16], index: 0, kind: input, shape index: {}]
  %s1 = inlined_call_operand.vmem [shape: f32[32,64], index: 1, kind: input, shape index: {}]
  %s2 = inlined_call_operand.hbm [shape: f32[64,16], index: 2, kind: input, shape index: {}]
  %s3 = inlined_call_operand.vmem [shape: f32[160,16], index: 3, kind: output, shape index: {}]
  %s4 = sld [smem:[#allocation0]]
  $region49: #{wavelet_transform.1} parent=0
    _
  %s6 = ssub.s32 1, %s4
  %s7 = scalar_select 0, %s6, %s4
  $region1: #{wavelet_transform.1} parent=0
    #allocation2 [shape = 'u8[32768]{0}', space=vmem, size = 0x8000, scoped, tag = 'input window, operand 2, single buffered']
    #allocation3 [shape = 's32[2]{0}', space=sflag, size = 0x8, scoped, tag = 'scoped memory for wavelet_transform.1']
    %8 = vsyncpa [#allocation3], 0
    loop: start=0, step=1, limit=4
    $region2: #{wavelet_transform.1} parent=1 // loop_pre_header
      _
    $region3: #{wavelet_transform.1} parent=1 // loop_header
      %s10 = sphi 0, %s14
      %p11 = scmp.ge.s32.totalorder %s10, 4
      %s20 = sphi 0, %s22
      %s23 = sphi 0, %s20
      %s24 = sphi 0, %s23
      %s40 = sphi 0, %s24
      %s46 = sphi 0, %s48
      %s49 = sphi 0, %s46
      %s50 = sphi 0, %s49
      %s66 = sphi 0, %s50
      %s70 = sphi 0, %s70
      %s72 = sphi 0, %s70
      %s73 = sphi 0, %s72
      %s87 = sphi 0, %s73
      %s93 = sphi 0, %s95
      %s96 = sphi 0, %s93
      %s97 = sphi 0, %s96
      %s113 = sphi 0, %s97
    $region4: #{wavelet_transform.1} parent=1 // loop_header_branch
      %13 = sbr.rel (%p11) target = $region8
    $region5: #{wavelet_transform.1} parent=1 // loop_body
      %s15 = ssub.s32 %s10, 1
      %s16 = ssub.s32 %s10, 2
      %s17 = sadd.s32 %s10, 1
      %s18 = ssub.s32 %s10, %s17
      %p19 = scmp.eq.s32.totalorder %s18, 0
      %s21 = sadd.s32 %s20, 1
      %s22 = scalar_select %p19, %s20, %s21
      %p25 = pneg %p19
      %p26 = scmp.eq.s32.totalorder %s10, 1
      %p27 = por %p25, %p26
      %p28 = scmp.ne.s32.totalorder %s20, %s23
      %p29 = scmp.eq.s32.totalorder %s10, 0
      %p30 = por %p28, %p29
      %p31 = scmp.ne.s32.totalorder %s20, %s23
      %p32 = scmp.eq.s32.totalorder %s15, 1
      %p33 = por %p31, %p32
      %p34 = scmp.ne.s32.totalorder %s23, %s24
      %p35 = scmp.eq.s32.totalorder %s15, 0
      %p36 = por %p34, %p35
      %p37 = scmp.ne.s32.totalorder %s23, %s24
      %p38 = scmp.eq.s32.totalorder %s16, 1
      %p39 = por %p37, %p38
      %p41 = scmp.ne.s32.totalorder %s24, %s40
      %p42 = scmp.eq.s32.totalorder %s16, 0
      %p43 = por %p41, %p42
      %s44 = ssub.s32 %s10, %s17
      %p45 = scmp.eq.s32.totalorder %s44, 0
      %s47 = sadd.s32 %s46, 1
      %s48 = scalar_select %p45, %s46, %s47
      %p51 = pneg %p45
      %p52 = scmp.eq.s32.totalorder %s10, 1
      %p53 = por %p51, %p52
      %p54 = scmp.ne.s32.totalorder %s46, %s49
      %p55 = scmp.eq.s32.totalorder %s10, 0
      %p56 = por %p54, %p55
      %p57 = scmp.ne.s32.totalorder %s46, %s49
      %p58 = scmp.eq.s32.totalorder %s15, 1
      %p59 = por %p57, %p58
      %p60 = scmp.ne.s32.totalorder %s49, %s50
      %p61 = scmp.eq.s32.totalorder %s15, 0
      %p62 = por %p60, %p61
      %p63 = scmp.ne.s32.totalorder %s49, %s50
      %p64 = scmp.eq.s32.totalorder %s16, 1
      %p65 = por %p63, %p64
      %p67 = scmp.ne.s32.totalorder %s50, %s66
      %p68 = scmp.eq.s32.totalorder %s16, 0
      %p69 = por %p67, %p68
      %s71 = sadd.s32 %s70, 1
      %p74 = scmp.eq.s32.totalorder %s10, 1
      %p75 = scmp.ne.s32.totalorder %s70, %s72
      %p76 = scmp.eq.s32.totalorder %s10, 0
      %p77 = por %p75, %p76
      %p78 = scmp.ne.s32.totalorder %s70, %s72
      %p79 = scmp.eq.s32.totalorder %s15, 1
      %p80 = por %p78, %p79
      %p81 = scmp.ne.s32.totalorder %s72, %s73
      %p82 = scmp.eq.s32.totalorder %s15, 0
      %p83 = por %p81, %p82
      %p84 = scmp.ne.s32.totalorder %s72, %s73
      %p85 = scmp.eq.s32.totalorder %s16, 1
      %p86 = por %p84, %p85
      %p88 = scmp.ne.s32.totalorder %s73, %s87
      %p89 = scmp.eq.s32.totalorder %s16, 0
      %p90 = por %p88, %p89
      %s91 = ssub.s32 %s10, %s17
      %p92 = scmp.eq.s32.totalorder %s91, 0
      %s94 = sadd.s32 %s93, 1
      %s95 = scalar_select %p92, %s93, %s94
      %p98 = pneg %p92
      %p99 = scmp.eq.s32.totalorder %s10, 1
      %p100 = por %p98, %p99
      %p101 = scmp.ne.s32.totalorder %s93, %s96
      %p102 = scmp.eq.s32.totalorder %s10, 0
      %p103 = por %p101, %p102
      %p104 = scmp.ne.s32.totalorder %s93, %s96
      %p105 = scmp.eq.s32.totalorder %s15, 1
      %p106 = por %p104, %p105
      %p107 = scmp.ne.s32.totalorder %s96, %s97
      %p108 = scmp.eq.s32.totalorder %s15, 0
      %p109 = por %p107, %p108
      %p110 = scmp.ne.s32.totalorder %s96, %s97
      %p111 = scmp.eq.s32.totalorder %s16, 1
      %p112 = por %p110, %p111
      %p114 = scmp.ne.s32.totalorder %s97, %s113
      %p115 = scmp.eq.s32.totalorder %s16, 0
      %p116 = por %p114, %p115
      %p117 = scmp.le.s32.totalorder 1, %s10
      %p118 = scmp.lt.s32.totalorder %s10, 3
      %p119 = pnand %p117, %p118
      %p120 = pneg %p119
      // Predicated region
      $region9: #{wavelet_transform.1} parent=5 // pred_check
        _
      $region10: #{wavelet_transform.1} parent=5 // pred_check_branch
        %122 = sbr.rel (%p119) target = $region12
      $region11: #{wavelet_transform.1} parent=5 // pred_region
        %s123 = ssub.s32 %s10, 1
        // Predicated region
        $region13: #{wavelet_transform.1} parent=11 // pred_check
          %p124 = pneg %p83
        $region14: #{wavelet_transform.1} parent=11 // pred_check_branch
          %126 = sbr.rel (%p124) target = $region16
        $region15: #{wavelet_transform.1} parent=11 // pred_region
          %s128 = ssub.s32 1024, 1024
          %129 = vsyncadd [#allocation3], %s128
          %s130 = sshll.u32 [#allocation2], 4
          %s131 = int_to_ptr.vmem [resolvable:$true] %s130
          %136 = dma.hbm_to_vmem [thread:$0]  %s2, 1024, %s131, [#allocation3], 128, 128, 8
        $region16: #{wavelet_transform.1} parent=11 // pred_fallthru
          _
      $region12: #{wavelet_transform.1} parent=5 // pred_fallthru
        _
      %p137 = scmp.lt.s32.totalorder %s10, 2
      // Predicated region
      $region17: #{wavelet_transform.1} parent=5 // pred_check
        %p138 = pneg %p137
      $region18: #{wavelet_transform.1} parent=5 // pred_check_branch
        %140 = sbr.rel (%p138) target = $region20
      $region19: #{wavelet_transform.1} parent=5 // pred_region
        // Predicated region
        $region21: #{wavelet_transform.1} parent=19 // pred_check
          %p141 = pneg %p30
        $region22: #{wavelet_transform.1} parent=19 // pred_check_branch
          %143 = sbr.rel (%p141) target = $region24
        $region23: #{wavelet_transform.1} parent=19 // pred_region
          %s144 = smul.u32 8, %s10
          %p145 = scmp.lt.s32.totalorder %s144, 15
          %s146 = scalar_select %p145, %s144, 15
          %s147 = smul.addr %s146, 8
          %s148 = scalar_lea.vmem %s0, %s147
          %s149 = smul.u32 8, %s10
        $region24: #{wavelet_transform.1} parent=19 // pred_fallthru
          _
        // Predicated region
        $region25: #{wavelet_transform.1} parent=19 // pred_check
          %p150 = pneg %p56
        $region26: #{wavelet_transform.1} parent=19 // pred_check_branch
          %152 = sbr.rel (%p150) target = $region28
        $region27: #{wavelet_transform.1} parent=19 // pred_region
          %s153 = smul.u32 2, %s10
          %p154 = scmp.lt.s32.totalorder %s153, 3
          %s155 = scalar_select %p154, %s153, 3
          %s156 = smul.addr %s155, 8
          %s157 = scalar_lea.vmem %s1, %s156
          %s158 = smul.u32 2, %s10
        $region28: #{wavelet_transform.1} parent=19 // pred_fallthru
          _
      $region20: #{wavelet_transform.1} parent=5 // pred_fallthru
        _
      %p159 = scmp.le.s32.totalorder 1, %s10
      %p160 = scmp.lt.s32.totalorder %s10, 3
      %p161 = pnand %p159, %p160
      %p162 = pneg %p161
      // Predicated region
      $region29: #{wavelet_transform.1} parent=5 // pred_check
        _
      $region30: #{wavelet_transform.1} parent=5 // pred_check_branch
        %164 = sbr.rel (%p161) target = $region32
      $region31: #{wavelet_transform.1} parent=5 // pred_region
        %s165 = ssub.s32 %s10, 1
        // Predicated region
        $region33: #{wavelet_transform.1} parent=31 // pred_check
          %p166 = pneg %p83
        $region34: #{wavelet_transform.1} parent=31 // pred_check_branch
          %168 = sbr.rel (%p166) target = $region36
        $region35: #{wavelet_transform.1} parent=31 // pred_region
          %169 = dma.done [#allocation3], 1024
        $region36: #{wavelet_transform.1} parent=31 // pred_fallthru
          _
        %s170 = smul.u32 8, %s15
        %p171 = scmp.lt.s32.totalorder %s170, 15
        %s172 = scalar_select %p171, %s170, 15
        %s173 = smul.addr %s172, 8
        %s174 = scalar_lea.vmem %s0, %s173
        %p175 = pneg %p36
        %p176 = pneg %p33
        %s177 = smul.u32 2, %s15
        %p178 = scmp.lt.s32.totalorder %s177, 3
        %s179 = scalar_select %p178, %s177, 3
        %s180 = smul.addr %s179, 8
        %s181 = scalar_lea.vmem %s1, %s180
        %p182 = pneg %p62
        %p183 = pneg %p59
        %p184 = pneg %p83
        %p185 = pneg %p80
        %p186 = pneg %p109
        %p187 = pneg %p106
        %s188 = smul.u32 10, %s15
        %p189 = scmp.lt.s32.totalorder %s188, 19
        %s190 = scalar_select %p189, %s188, 19
        %s191 = smul.addr %s190, 8
        %s192 = scalar_lea.vmem %s3, %s191
        %s193 = smul.u32 8, %s15
        %p194 = scmp.lt.s32.totalorder %s193, 15
        %s195 = scalar_select %p194, %s193, 15
        %s196 = smul.addr %s195, 8
        %s197 = scalar_lea.vmem %s0, %s196
        %s198 = smul.u32 8, %s15
        %s199 = smul.u32 2, %s15
        %p200 = scmp.lt.s32.totalorder %s199, 3
        %s201 = scalar_select %p200, %s199, 3
        %s202 = smul.addr %s201, 8
        %s203 = scalar_lea.vmem %s1, %s202
        %s204 = smul.u32 2, %s15
        %s205 = smul.u32 10, %s15
        %p206 = scmp.lt.s32.totalorder %s205, 19
        %s207 = scalar_select %p206, %s205, 19
        %s208 = smul.addr %s207, 8
        %s209 = scalar_lea.vmem %s3, %s208
        %s210 = smul.u32 10, %s15
        %v211 = vld [vmem:[%s203] sm:$0xff]
        %v212 = vld [vmem:[%s203 + $0x8] sm:$0xff]
        %v213 = vld [vmem:[#allocation2] sm:$0xff]
        %v214 = vld [vmem:[#allocation2 + $0x8] sm:$0xff]
        %v215 = vld [vmem:[#allocation2 + $0x10] sm:$0xff]
        %v216 = vld [vmem:[#allocation2 + $0x18] sm:$0xff]
        %v217 = vld [vmem:[#allocation2 + $0x20] sm:$0xff]
        %v218 = vld [vmem:[#allocation2 + $0x28] sm:$0xff]
        %v219 = vld [vmem:[#allocation2 + $0x30] sm:$0xff]
        %v220 = vld [vmem:[#allocation2 + $0x38] sm:$0xff]
        %vm221 = vcmask 523264
        %v223 = vsel %vm221, %v211, 0
        %v226 = vsel %vm221, %v212, 0
        %228 = vmatprep.subr.mxu0 0.0
        %229 = vmatpush1.msra.mxu0 %v213
        %230 = vmatprep.subr.mxu0 0.0
        %231 = vmatpush1.msra.mxu0 %v214
        %232 = vmatprep.subr.mxu0 0.0
        %233 = vmatpush1.msra.mxu0 %v215
        %234 = vmatprep.subr.mxu0 0.0
        %235 = vmatpush1.msra.mxu0 %v216
        %236 = vmatprep.subr.mxu0 0.0
        %237 = vmatpush1.msra.mxu0 %v217
        %238 = vmatprep.subr.mxu0 0.0
        %239 = vmatpush1.msra.mxu0 %v218
        %240 = vmatprep.subr.mxu0 0.0
        %241 = vmatpush1.msra.mxu0 %v219
        %242 = vmatprep.subr.mxu0 0.0
        %243 = vmatpush1.msra.mxu0 %v220
        %244 = vmatprep.subr.mxu0 0.0
        %245 = vmatpush1.msra.mxu0 0.0
        %246 = vmatprep.subr.mxu0 0.0
        %247 = vmatpush1.msra.mxu0 0.0
        %248 = vmatprep.subr.mxu0 0.0
        %249 = vmatpush1.msra.mxu0 0.0
        %250 = vmatprep.subr.mxu0 0.0
        %251 = vmatpush1.msra.mxu0 0.0
        %252 = vmatprep.subr.mxu0 0.0
        %253 = vmatpush1.msra.mxu0 0.0
        %254 = vmatprep.subr.mxu0 0.0
        %255 = vmatpush1.msra.mxu0 0.0
        %256 = vmatprep.subr.mxu0 0.0
        %257 = vmatpush1.msra.mxu0 0.0
        %258 = vmatprep.subr.mxu0 0.0
        %259 = vmatpush1.msra.mxu0 0.0
        %260 = vmatprep.subr.mxu0 0.0
        %261 = vmatpush1.msra.mxu0 0.0
        %262 = vmatprep.subr.mxu0 0.0
        %263 = vmatpush1.msra.mxu0 0.0
        %264 = vmatprep.subr.mxu0 0.0
        %265 = vmatpush1.msra.mxu0 0.0
        %266 = vmatprep.subr.mxu0 0.0
        %267 = vmatpush1.msra.mxu0 0.0
        %268 = vmatprep.subr.mxu0 0.0
        %269 = vmatpush1.msra.mxu0 0.0
        %270 = vmatprep.subr.mxu0 0.0
        %271 = vmatpush1.msra.mxu0 0.0
        %272 = vmatprep.subr.mxu0 0.0
        %273 = vmatpush1.msra.mxu0 0.0
        %274 = vmatprep.subr.mxu0 0.0
        %275 = vmatpush1.msra.mxu0 0.0
        %276 = vmatprep.subr.mxu0 0.0
        %277 = vmatpush1.msra.mxu0 0.0
        %278 = vmatprep.subr.mxu0 0.0
        %279 = vmatpush1.msra.mxu0 0.0
        %280 = vmatprep.subr.mxu0 0.0
        %281 = vmatpush1.msra.mxu0 0.0
        %282 = vmatprep.subr.mxu0 0.0
        %283 = vmatpush1.msra.mxu0 0.0
        %284 = vmatprep.subr.mxu0 0.0
        %285 = vmatpush1.msra.mxu0 0.0
        %286 = vmatprep.subr.mxu0 0.0
        %287 = vmatpush1.msra.mxu0 0.0
        %288 = vmatprep.subr.mxu0 0.0
        %289 = vmatpush1.msra.mxu0 0.0
        %290 = vmatprep.subr.mxu0 0.0
        %291 = vmatpush1.msra.mxu0 0.0
        %292 = vmatprep.mubr.f32.mxu0 0.0
        %293 = vmatmul.mubr.f32.gmra.mrb[0].mxu0 %v223
        %v294 = vpop.f32.mrb[0].mxu0
        %v295 = vadd.f32 0.0, %v294
        %v296 = vpop.f32.mrb[0].mxu0
        %297 = vmatprep.mubr.f32.mxu0 0.0
        %298 = vmatmul.mubr.f32.gmra.mrb[0].mxu0 %v226
        %v299 = vpop.f32.mrb[0].mxu0
        %v300 = vadd.f32 0.0, %v299
        %v301 = vpop.f32.mrb[0].mxu0
        %302 = vdwg.mxu0
        %v303 = vlaneseq
        %v304 = vand.u32 %v303, 127
        %vm305 = vcmp.eq.s32.totalorder %v304, 15
        %v306 = vsel %vm305, 0.0, 0.70710677
        %vm307 = vcmask 125952
        %308 = vst.msk [vmem:[%s209] sm:$0xf] %vm307, %v295
        %v309 = vld [vmem:[%s197] sm:$0xff]
        %v310 = vld [vmem:[%s197 + $0x8] sm:$0xff]
        %v311 = vmul.f32 %v309, 0.70710677
        %v312 = vmul.f32 %v310, 0.70710677
        %vm313 = vcmask 1047680
        %314 = vrot.lane.b32.xlu0 %v309, 16
        %v315 = vpop.permute.xlu0 %314
        %v316 = vsel %vm313, %v315, %v309
        %317 = vrot.lane.b32.xlu0 %v310, 16
        %v318 = vpop.permute.xlu0 %317
        %v319 = vsel %vm313, %v318, %v310
        %320 = vrot.lane.b32.xlu0 %v316, 16
        %v321 = vpop.permute.xlu0 %320
        %322 = vrot.lane.b32.xlu0 %v319, 16
        %v323 = vpop.permute.xlu0 %322
        %v324 = vsel %vm313, %v321, %v309
        %v325 = vsel %vm313, %v323, %v310
        %328 = vrot.lane.b32.xlu0 %v324, 127
        %v329 = vpop.permute.xlu0 %328
        %330 = vrot.lane.b32.xlu0 %v325, 127
        %v331 = vpop.permute.xlu0 %330
        %v334 = vmul.f32 %v306, %v329
        %v335 = vmul.f32 %v306, %v331
        %v336 = vadd.f32 %v311, %v334
        %v337 = vadd.f32 %v312, %v335
        %338 = vxpose.xlu0.b32.start [1/16] %v336, 128
        %339 = vxpose.xlu0.b32.cont [2/16] %v337, 128
        %340 = vxpose.xlu0.b32.cont [3/16] 0.0, 128
        %341 = vxpose.xlu0.b32.cont [4/16] 0.0, 128
        %342 = vxpose.xlu0.b32.cont [5/16] 0.0, 128
        %343 = vxpose.xlu0.b32.cont [6/16] 0.0, 128
        %344 = vxpose.xlu0.b32.cont [7/16] 0.0, 128
        %345 = vxpose.xlu0.b32.cont [8/16] 0.0, 128
        %346 = vxpose.xlu0.b32.cont [9/16] 0.0, 128
        %347 = vxpose.xlu0.b32.cont [10/16] 0.0, 128
        %348 = vxpose.xlu0.b32.cont [11/16] 0.0, 128
        %349 = vxpose.xlu0.b32.cont [12/16] 0.0, 128
        %350 = vxpose.xlu0.b32.cont [13/16] 0.0, 128
        %351 = vxpose.xlu0.b32.cont [14/16] 0.0, 128
        %352 = vxpose.xlu0.b32.cont [15/16] 0.0, 128
        %353 = vxpose.xlu0.b32.end [16/16] 0.0, 128
        %v354 = vpop.trf.xlu0
        %v355 = vpop.trf.xlu0
        %v356 = vpop.trf.xlu0
        %v357 = vpop.trf.xlu0
        %v358 = vpop.trf.xlu0
        %v359 = vpop.trf.xlu0
        %v360 = vpop.trf.xlu0
        %v361 = vpop.trf.xlu0
        %v362 = vpop.trf.xlu0
        %v363 = vpop.trf.xlu0
        %v364 = vpop.trf.xlu0
        %v365 = vpop.trf.xlu0
        %v366 = vpop.trf.xlu0
        %v367 = vpop.trf.xlu0
        %v368 = vpop.trf.xlu0
        %v369 = vpop.trf.xlu0
        %vm370 = vcmask 130048
        %371 = vst.msk [vmem:[%s209 + $0x4] sm:$0xff] %vm370, %v354
        %372 = vst.msk [vmem:[%s209 + $0xc] sm:$0xff] %vm370, %v355
        %vm373 = vcmask 130052
        %374 = vst.msk [vmem:[%s209 + $0x10] sm:$0xf0] %vm373, %v295
        %v375 = vld [vmem:[%s197 + $0x10] sm:$0xff]
        %v376 = vld [vmem:[%s197 + $0x18] sm:$0xff]
        %v377 = vmul.f32 %v375, 0.70710677
        %v378 = vmul.f32 %v376, 0.70710677
        %379 = vrot.lane.b32.xlu0 %v375, 16
        %v380 = vpop.permute.xlu0 %379
        %v381 = vsel %vm313, %v380, %v375
        %382 = vrot.lane.b32.xlu0 %v376, 16
        %v383 = vpop.permute.xlu0 %382
        %v384 = vsel %vm313, %v383, %v376
        %385 = vrot.lane.b32.xlu0 %v381, 16
        %v386 = vpop.permute.xlu0 %385
        %387 = vrot.lane.b32.xlu0 %v384, 16
        %v388 = vpop.permute.xlu0 %387
        %v389 = vsel %vm313, %v386, %v375
        %v390 = vsel %vm313, %v388, %v376
        %393 = vrot.lane.b32.xlu0 %v389, 127
        %v394 = vpop.permute.xlu0 %393
        %395 = vrot.lane.b32.xlu0 %v390, 127
        %v396 = vpop.permute.xlu0 %395
        %v399 = vmul.f32 %v306, %v394
        %v400 = vmul.f32 %v306, %v396
        %v401 = vadd.f32 %v377, %v399
        %v402 = vadd.f32 %v378, %v400
        %403 = vxpose.xlu0.b32.start [1/16] %v401, 128
        %404 = vxpose.xlu0.b32.cont [2/16] %v402, 128
        %405 = vxpose.xlu0.b32.cont [3/16] 0.0, 128
        %406 = vxpose.xlu0.b32.cont [4/16] 0.0, 128
        %407 = vxpose.xlu0.b32.cont [5/16] 0.0, 128
        %408 = vxpose.xlu0.b32.cont [6/16] 0.0, 128
        %409 = vxpose.xlu0.b32.cont [7/16] 0.0, 128
        %410 = vxpose.xlu0.b32.cont [8/16] 0.0, 128
        %411 = vxpose.xlu0.b32.cont [9/16] 0.0, 128
        %412 = vxpose.xlu0.b32.cont [10/16] 0.0, 128
        %413 = vxpose.xlu0.b32.cont [11/16] 0.0, 128
        %414 = vxpose.xlu0.b32.cont [12/16] 0.0, 128
        %415 = vxpose.xlu0.b32.cont [13/16] 0.0, 128
        %416 = vxpose.xlu0.b32.cont [14/16] 0.0, 128
        %417 = vxpose.xlu0.b32.cont [15/16] 0.0, 128
        %418 = vxpose.xlu0.b32.end [16/16] 0.0, 128
        %v419 = vpop.trf.xlu0
        %v420 = vpop.trf.xlu0
        %v421 = vpop.trf.xlu0
        %v422 = vpop.trf.xlu0
        %v423 = vpop.trf.xlu0
        %v424 = vpop.trf.xlu0
        %v425 = vpop.trf.xlu0
        %v426 = vpop.trf.xlu0
        %v427 = vpop.trf.xlu0
        %v428 = vpop.trf.xlu0
        %v429 = vpop.trf.xlu0
        %v430 = vpop.trf.xlu0
        %v431 = vpop.trf.xlu0
        %v432 = vpop.trf.xlu0
        %v433 = vpop.trf.xlu0
        %v434 = vpop.trf.xlu0
        %435 = vst.msk [vmem:[%s209 + $0x18] sm:$0xff] %vm370, %v419
        %436 = vst.msk [vmem:[%s209 + $0x20] sm:$0xff] %vm370, %v420
        %437 = vst.msk [vmem:[%s209 + $0x28] sm:$0xf] %vm307, %v300
        %v438 = vld [vmem:[%s197 + $0x20] sm:$0xff]
        %v439 = vld [vmem:[%s197 + $0x28] sm:$0xff]
        %v440 = vmul.f32 %v438, 0.70710677
        %v441 = vmul.f32 %v439, 0.70710677
        %442 = vrot.lane.b32.xlu0 %v438, 16
        %v443 = vpop.permute.xlu0 %442
        %v444 = vsel %vm313, %v443, %v438
        %445 = vrot.lane.b32.xlu0 %v439, 16
        %v446 = vpop.permute.xlu0 %445
        %v447 = vsel %vm313, %v446, %v439
        %448 = vrot.lane.b32.xlu0 %v444, 16
        %v449 = vpop.permute.xlu0 %448
        %450 = vrot.lane.b32.xlu0 %v447, 16
        %v451 = vpop.permute.xlu0 %450
        %v452 = vsel %vm313, %v449, %v438
        %v453 = vsel %vm313, %v451, %v439
        %456 = vrot.lane.b32.xlu0 %v452, 127
        %v457 = vpop.permute.xlu0 %456
        %458 = vrot.lane.b32.xlu0 %v453, 127
        %v459 = vpop.permute.xlu0 %458
        %v462 = vmul.f32 %v306, %v457
        %v463 = vmul.f32 %v306, %v459
        %v464 = vadd.f32 %v440, %v462
        %v465 = vadd.f32 %v441, %v463
        %466 = vxpose.xlu0.b32.start [1/16] %v464, 128
        %467 = vxpose.xlu0.b32.cont [2/16] %v465, 128
        %468 = vxpose.xlu0.b32.cont [3/16] 0.0, 128
        %469 = vxpose.xlu0.b32.cont [4/16] 0.0, 128
        %470 = vxpose.xlu0.b32.cont [5/16] 0.0, 128
        %471 = vxpose.xlu0.b32.cont [6/16] 0.0, 128
        %472 = vxpose.xlu0.b32.cont [7/16] 0.0, 128
        %473 = vxpose.xlu0.b32.cont [8/16] 0.0, 128
        %474 = vxpose.xlu0.b32.cont [9/16] 0.0, 128
        %475 = vxpose.xlu0.b32.cont [10/16] 0.0, 128
        %476 = vxpose.xlu0.b32.cont [11/16] 0.0, 128
        %477 = vxpose.xlu0.b32.cont [12/16] 0.0, 128
        %478 = vxpose.xlu0.b32.cont [13/16] 0.0, 128
        %479 = vxpose.xlu0.b32.cont [14/16] 0.0, 128
        %480 = vxpose.xlu0.b32.cont [15/16] 0.0, 128
        %481 = vxpose.xlu0.b32.end [16/16] 0.0, 128
        %v482 = vpop.trf.xlu0
        %v483 = vpop.trf.xlu0
        %v484 = vpop.trf.xlu0
        %v485 = vpop.trf.xlu0
        %v486 = vpop.trf.xlu0
        %v487 = vpop.trf.xlu0
        %v488 = vpop.trf.xlu0
        %v489 = vpop.trf.xlu0
        %v490 = vpop.trf.xlu0
        %v491 = vpop.trf.xlu0
        %v492 = vpop.trf.xlu0
        %v493 = vpop.trf.xlu0
        %v494 = vpop.trf.xlu0
        %v495 = vpop.trf.xlu0
        %v496 = vpop.trf.xlu0
        %v497 = vpop.trf.xlu0
        %498 = vst.msk [vmem:[%s209 + $0x2c] sm:$0xff] %vm370, %v482
        %499 = vst.msk [vmem:[%s209 + $0x34] sm:$0xff] %vm370, %v483
        %500 = vst.msk [vmem:[%s209 + $0x38] sm:$0xf0] %vm373, %v300
        %v501 = vld [vmem:[%s197 + $0x30] sm:$0xff]
        %v502 = vld [vmem:[%s197 + $0x38] sm:$0xff]
        %v503 = vmul.f32 %v501, 0.70710677
        %v504 = vmul.f32 %v502, 0.70710677
        %505 = vrot.lane.b32.xlu0 %v501, 16
        %v506 = vpop.permute.xlu0 %505
        %v507 = vsel %vm313, %v506, %v501
        %508 = vrot.lane.b32.xlu0 %v502, 16
        %v509 = vpop.permute.xlu0 %508
        %v510 = vsel %vm313, %v509, %v502
        %511 = vrot.lane.b32.xlu0 %v507, 16
        %v512 = vpop.permute.xlu0 %511
        %513 = vrot.lane.b32.xlu0 %v510, 16
        %v514 = vpop.permute.xlu0 %513
        %v515 = vsel %vm313, %v512, %v501
        %v516 = vsel %vm313, %v514, %v502
        %519 = vrot.lane.b32.xlu0 %v515, 127
        %v520 = vpop.permute.xlu0 %519
        %521 = vrot.lane.b32.xlu0 %v516, 127
        %v522 = vpop.permute.xlu0 %521
        %v525 = vmul.f32 %v306, %v520
        %v526 = vmul.f32 %v306, %v522
        %v527 = vadd.f32 %v503, %v525
        %v528 = vadd.f32 %v504, %v526
        %529 = vxpose.xlu0.b32.start [1/16] %v527, 128
        %530 = vxpose.xlu0.b32.cont [2/16] %v528, 128
        %531 = vxpose.xlu0.b32.cont [3/16] 0.0, 128
        %532 = vxpose.xlu0.b32.cont [4/16] 0.0, 128
        %533 = vxpose.xlu0.b32.cont [5/16] 0.0, 128
        %534 = vxpose.xlu0.b32.cont [6/16] 0.0, 128
        %535 = vxpose.xlu0.b32.cont [7/16] 0.0, 128
        %536 = vxpose.xlu0.b32.cont [8/16] 0.0, 128
        %537 = vxpose.xlu0.b32.cont [9/16] 0.0, 128
        %538 = vxpose.xlu0.b32.cont [10/16] 0.0, 128
        %539 = vxpose.xlu0.b32.cont [11/16] 0.0, 128
        %540 = vxpose.xlu0.b32.cont [12/16] 0.0, 128
        %541 = vxpose.xlu0.b32.cont [13/16] 0.0, 128
        %542 = vxpose.xlu0.b32.cont [14/16] 0.0, 128
        %543 = vxpose.xlu0.b32.cont [15/16] 0.0, 128
        %544 = vxpose.xlu0.b32.end [16/16] 0.0, 128
        %v545 = vpop.trf.xlu0
        %v546 = vpop.trf.xlu0
        %v547 = vpop.trf.xlu0
        %v548 = vpop.trf.xlu0
        %v549 = vpop.trf.xlu0
        %v550 = vpop.trf.xlu0
        %v551 = vpop.trf.xlu0
        %v552 = vpop.trf.xlu0
        %v553 = vpop.trf.xlu0
        %v554 = vpop.trf.xlu0
        %v555 = vpop.trf.xlu0
        %v556 = vpop.trf.xlu0
        %v557 = vpop.trf.xlu0
        %v558 = vpop.trf.xlu0
        %v559 = vpop.trf.xlu0
        %v560 = vpop.trf.xlu0
        %561 = vst.msk [vmem:[%s209 + $0x40] sm:$0xff] %vm370, %v545
        %562 = vst.msk [vmem:[%s209 + $0x48] sm:$0xff] %vm370, %v546
        %s563 = smul.u32 10, %s15
        %p564 = scmp.lt.s32.totalorder %s563, 19
        %s565 = scalar_select %p564, %s563, 19
        %s566 = smul.addr %s565, 8
        %s567 = scalar_lea.vmem %s3, %s566
        // Predicated region
        $region37: #{wavelet_transform.1} parent=31 // pred_check
          %p568 = pneg %p106
        $region38: #{wavelet_transform.1} parent=31 // pred_check_branch
          %570 = sbr.rel (%p568) target = $region40
        $region39: #{wavelet_transform.1} parent=31 // pred_region
          %s571 = smul.u32 10, %s15
        $region40: #{wavelet_transform.1} parent=31 // pred_fallthru
          _
      $region32: #{wavelet_transform.1} parent=5 // pred_fallthru
        _
      %p572 = scmp.le.s32.totalorder 2, %s10
      // Predicated region
      $region41: #{wavelet_transform.1} parent=5 // pred_check
        %p573 = pneg %p572
      $region42: #{wavelet_transform.1} parent=5 // pred_check_branch
        %575 = sbr.rel (%p573) target = $region44
      $region43: #{wavelet_transform.1} parent=5 // pred_region
        %s576 = ssub.s32 %s10, 2
        // Predicated region
        $region45: #{wavelet_transform.1} parent=43 // pred_check
          %p577 = pneg %p112
        $region46: #{wavelet_transform.1} parent=43 // pred_check_branch
          %579 = sbr.rel (%p577) target = $region48
        $region47: #{wavelet_transform.1} parent=43 // pred_region
          %s580 = smul.u32 10, %s16
          %p581 = scmp.lt.s32.totalorder %s580, 19
          %s582 = scalar_select %p581, %s580, 19
          %s583 = smul.addr %s582, 8
          %s584 = scalar_lea.vmem %s3, %s583
        $region48: #{wavelet_transform.1} parent=43 // pred_fallthru
          _
      $region44: #{wavelet_transform.1} parent=5 // pred_fallthru
        _
    $region6: #{wavelet_transform.1} parent=1 // loop_footer
      %s14 = sadd.s32 1, %s10
    $region7: #{wavelet_transform.1} parent=1 // loop_footer_branch
      %9 = sbr.rel target = $region3
    $region8: #{wavelet_transform.1} parent=1 // loop_exit
      _
    %585 = vsyncpa [#allocation3], 1
    %s586 = scalar_lea.sflag [#allocation3], 1
    %587 = vsyncpa %s586, 1

</llo_original>
